<compile_context>
chip_gen: v6e
topology: v6e:2x2x1
jax: 0.10.0
libtpu: 0.0.40
codegen_flags: <defaults>
</compile_context>

<pallas_src>
import functools
import math

import jax
import jax.numpy as jnp
from jax import lax
from jax.experimental import pallas as pl
from jax.experimental.pallas import tpu as pltpu


def _mix32(x):
    """lowbias32 finalizer (Chris Wellons): uint32 -> well-mixed uint32."""
    x = x ^ (x >> 16)
    x = x * jnp.uint32(0x7FEB352D)
    x = x ^ (x >> 15)
    x = x * jnp.uint32(0x846CA68B)
    x = x ^ (x >> 16)
    return x


def _add_gaussian_noise_kernel(seed_ref, x_ref, o_ref, *, mean, std):
    tr, cols = x_ref.shape            # static block shape
    hr = tr // 2                      # wrapper guarantees tr is even
    i = pl.program_id(0)
    seed = seed_ref[0]                # int32 scalar from SMEM (scalar prefetch)

    # One globally-unique counter per (row, col) of the *half* block; every
    # counter is hashed once and yields two normals that fill the top and
    # bottom halves of the block (row-axis split -> two sublane-aligned,
    # full-lane-width stores, no concatenate / cross-lane relayout).
    row = lax.broadcasted_iota(jnp.int32, (hr, cols), 0)
    col = lax.broadcasted_iota(jnp.int32, (hr, cols), 1)
    local = row * cols + col                              # pair index in block
    # Block offset and seed are folded into one scalar (scalar-unit work).
    offs = (i * (hr * cols)).astype(jnp.uint32) + (
        seed.astype(jnp.uint32) * jnp.uint32(0x9E3779B9)
    )
    b = _mix32(local.astype(jnp.uint32) + offs)

    # Two 16-bit uniforms per hash via the mantissa bit-trick (no int->float
    # converts, no log(0)).  16-bit u1 caps |z| at ~4.7 sigma.
    one = jnp.uint32(0x3F800000)
    u1 = 2.0 - lax.bitcast_convert_type(((b >> 16) << 7) | one, jnp.float32)   # (0, 1]
    u2 = lax.bitcast_convert_type(((b & jnp.uint32(0xFFFF)) << 7) | one,
                                  jnp.float32) - 1.0                           # [0, 1)

    # Box-Muller with std folded into the radius; the sin branch is rebuilt
    # from cos:  sin(t) = +-sqrt(1 - cos(t)^2)  with  sign(sin(t)) == (u2 < 0.5),
    # so only one trig polynomial runs per pair (log/sqrt go to the EUP slot).
    r = jnp.sqrt(jnp.log(u1) * jnp.float32(-2.0 * std * std))
    theta = jnp.float32(2.0 * math.pi) * u2
    c = jnp.cos(theta)
    s = jnp.sqrt(jnp.maximum(1.0 - c * c, 0.0))           # guard tiny negatives
    z_top = r * c
    z_bot = jnp.where(u2 < 0.5, r, -r) * s

    mean_f = jnp.float32(mean)
    o_ref[:hr, :] = (
        x_ref[:hr, :].astype(jnp.float32) + (z_top + mean_f)
    ).astype(o_ref.dtype)
    o_ref[hr:, :] = (
        x_ref[hr:, :].astype(jnp.float32) + (z_bot + mean_f)
    ).astype(o_ref.dtype)


def _choose_layout(n):
    """Pick a lane-dense (rows, cols) view; prefer no padding and rows % 16 == 0."""
    for cols in (1024, 512, 256, 128):
        if n % cols == 0 and (n // cols) % 16 == 0:
            return cols, 0
    for cols in (1024, 512, 256, 128):
        if n % cols == 0 and (n // cols) % 2 == 0:
            return cols, 0
    # Ragged / odd-row total: pad so rows becomes a multiple of 16.
    cols = 128
    pad = (-n) % (cols * 16)
    return cols, pad


def add_gaussian_noise(x, seed, mean=0.0, std=1.0):
    """out = x + N(0,1)*std + mean, noise generated inside the kernel."""
    orig_shape = x.shape
    n = x.size
    if n == 0:
        return x

    cols, pad = _choose_layout(n)
    flat = x.reshape(-1)
    if pad:
        flat = jnp.pad(flat, (0, pad))
    rows = flat.shape[0] // cols      # always even (>= 2) by construction
    x2d = flat.reshape(rows, cols)

    # ~2 MiB f32 input blocks: near the HBM roofline on v5e/v6e/v7x while
    # in+out double buffering plus elementwise temporaries stay well inside a
    # 32 MiB scoped-VMEM budget (v7x has only 64 MiB physical VMEM per core).
    target_rows = max(16, ((2 << 20) // (4 * cols)) // 16 * 16)
    # Prefer >= 8 blocks when there is enough work so the "parallel" grid axis
    # load-balances across TensorCores (v7x megacore); tiny inputs -> 1 block.
    desired_blocks = 8
    tr = min(target_rows, max(16, (rows // desired_blocks) // 16 * 16))
    if tr >= rows:
        tr = rows                     # single block; rows is guaranteed even
    grid = (pl.cdiv(rows, tr),)       # partial tail block OK (masked writeback)

    kernel = functools.partial(
        _add_gaussian_noise_kernel, mean=float(mean), std=float(std)
    )
    seed_arr = jnp.asarray(seed, dtype=jnp.int32).reshape((1,))

    out2d = pl.pallas_call(
        kernel,
        out_shape=jax.ShapeDtypeStruct((rows, cols), x.dtype),
        grid_spec=pltpu.PrefetchScalarGridSpec(
            num_scalar_prefetch=1,                     # seed -> SMEM
            grid=grid,
            in_specs=[pl.BlockSpec((tr, cols), lambda i, seed_ref: (i, 0))],
            out_specs=pl.BlockSpec((tr, cols), lambda i, seed_ref: (i, 0)),
        ),
        compiler_params=pltpu.CompilerParams(
            # Counters are globally unique, so blocks are fully independent:
            # safe to shard the grid across TensorCores (v7x megacore).
            dimension_semantics=("parallel",),
            vmem_limit_bytes=32 * 1024 * 1024,
        ),
    )(seed_arr, x2d)

    out = out2d.reshape(-1)[:n] if pad else out2d
    return out.reshape(orig_shape)


if __name__ == "__main__":
    key = jax.random.PRNGKey(0)
    # Small NCHW input consistent with the module's usage in ICAMCNET.
    x = jax.random.normal(key, (2, 4, 16, 16), dtype=jnp.float32)

    out = add_gaussian_noise(x, seed=0, mean=0.0, std=1.0)
    out = jax.block_until_ready(out)

    assert out.shape == x.shape and out.dtype == x.dtype
    noise = out - x
    assert bool(jnp.isfinite(noise).all())
    m = float(jnp.mean(noise))
    s = float(jnp.std(noise))
    assert abs(m) < 0.25, f"noise mean {m}"
    assert 0.75 < s < 1.25, f"noise std {s}"

    # Deterministic per seed.
    out2 = jax.block_until_ready(add_gaussian_noise(x, seed=0, mean=0.0, std=1.0))
    assert bool(jnp.array_equal(out, out2))

    # mean / std parameters are honored.
    out3 = jax.block_until_ready(add_gaussian_noise(x, seed=3, mean=0.5, std=0.1))
    n3 = out3 - x
    assert abs(float(jnp.mean(n3)) - 0.5) < 0.05
    assert 0.05 < float(jnp.std(n3)) < 0.2

    print("KERNEL_OK")
</pallas_src>

<mosaic_0001>
module attributes {stable_mosaic.version = 11 : i64} {
  func.func @_add_gaussian_noise_kernel(%arg0: i32, %arg1: memref<1xi32, #tpu.memory_space<smem>>, %arg2: memref<16x128xf32, #tpu.memory_space<vmem>>, %arg3: memref<16x128xf32, #tpu.memory_space<vmem>>) attributes {dimension_semantics = [#tpu.dimension_semantics<parallel>], iteration_bounds = array<i64: 1>, scalar_prefetch = 1 : i64, scratch_operands = 0 : i64, tpu.core_type = #tpu.core_type<tc>, window_params = [{transform_indices = @transform_0, window_bounds = array<i64: 16, 128>}, {transform_indices = @transform_1, window_bounds = array<i64: 16, 128>}]} {
    %c0 = arith.constant 0 : index
    %0 = memref.load %arg1[%c0] : memref<1xi32, #tpu.memory_space<smem>>
    %1 = tpu.iota {dimensions = array<i32: 0>} : vector<8x128xi32>
    %2 = tpu.iota {dimensions = array<i32: 1>} : vector<8x128xi32>
    %c128_i32 = arith.constant 128 : i32
    %3 = vector.broadcast %c128_i32 : i32 to vector<8x128xi32>
    %4 = arith.muli %1, %3 : vector<8x128xi32>
    %5 = arith.addi %4, %2 : vector<8x128xi32>
    %c1024_i32 = arith.constant 1024 : i32
    %6 = arith.muli %arg0, %c1024_i32 : i32
    %c-1640531527_i32 = arith.constant -1640531527 : i32
    %7 = arith.muli %0, %c-1640531527_i32 : i32
    %8 = arith.addi %6, %7 : i32
    %9 = vector.broadcast %8 : i32 to vector<8x128xi32>
    %10 = arith.addi %5, %9 : vector<8x128xi32>
    %c16_i32 = arith.constant 16 : i32
    %11 = vector.broadcast %c16_i32 : i32 to vector<8x128xi32>
    %12 = arith.shrui %10, %11 : vector<8x128xi32>
    %13 = arith.xori %10, %12 : vector<8x128xi32>
    %c2146121005_i32 = arith.constant 2146121005 : i32
    %14 = vector.broadcast %c2146121005_i32 : i32 to vector<8x128xi32>
    %15 = arith.muli %13, %14 : vector<8x128xi32>
    %c15_i32 = arith.constant 15 : i32
    %16 = vector.broadcast %c15_i32 : i32 to vector<8x128xi32>
    %17 = arith.shrui %15, %16 : vector<8x128xi32>
    %18 = arith.xori %15, %17 : vector<8x128xi32>
    %c-2073254261_i32 = arith.constant -2073254261 : i32
    %19 = vector.broadcast %c-2073254261_i32 : i32 to vector<8x128xi32>
    %20 = arith.muli %18, %19 : vector<8x128xi32>
    %c16_i32_0 = arith.constant 16 : i32
    %21 = vector.broadcast %c16_i32_0 : i32 to vector<8x128xi32>
    %22 = arith.shrui %20, %21 : vector<8x128xi32>
    %23 = arith.xori %20, %22 : vector<8x128xi32>
    %c16_i32_1 = arith.constant 16 : i32
    %24 = vector.broadcast %c16_i32_1 : i32 to vector<8x128xi32>
    %25 = arith.shrui %23, %24 : vector<8x128xi32>
    %c7_i32 = arith.constant 7 : i32
    %26 = vector.broadcast %c7_i32 : i32 to vector<8x128xi32>
    %27 = arith.shli %25, %26 : vector<8x128xi32>
    %c1065353216_i32 = arith.constant 1065353216 : i32
    %28 = vector.broadcast %c1065353216_i32 : i32 to vector<8x128xi32>
    %29 = arith.ori %27, %28 : vector<8x128xi32>
    %30 = tpu.bitcast %29 : vector<8x128xi32> -> vector<8x128xf32>
    %cst = arith.constant 2.000000e+00 : f32
    %31 = vector.broadcast %cst : f32 to vector<8x128xf32>
    %32 = arith.subf %31, %30 : vector<8x128xf32>
    %c65535_i32 = arith.constant 65535 : i32
    %33 = vector.broadcast %c65535_i32 : i32 to vector<8x128xi32>
    %34 = arith.andi %23, %33 : vector<8x128xi32>
    %c7_i32_2 = arith.constant 7 : i32
    %35 = vector.broadcast %c7_i32_2 : i32 to vector<8x128xi32>
    %36 = arith.shli %34, %35 : vector<8x128xi32>
    %c1065353216_i32_3 = arith.constant 1065353216 : i32
    %37 = vector.broadcast %c1065353216_i32_3 : i32 to vector<8x128xi32>
    %38 = arith.ori %36, %37 : vector<8x128xi32>
    %39 = tpu.bitcast %38 : vector<8x128xi32> -> vector<8x128xf32>
    %cst_4 = arith.constant 1.000000e+00 : f32
    %40 = vector.broadcast %cst_4 : f32 to vector<8x128xf32>
    %41 = arith.subf %39, %40 : vector<8x128xf32>
    %42 = math.log %32 : vector<8x128xf32>
    %cst_5 = arith.constant -2.000000e+00 : f32
    %43 = vector.broadcast %cst_5 : f32 to vector<8x128xf32>
    %44 = arith.mulf %42, %43 : vector<8x128xf32>
    %45 = math.sqrt %44 : vector<8x128xf32>
    %cst_6 = arith.constant 6.28318548 : f32
    %46 = vector.broadcast %cst_6 : f32 to vector<8x128xf32>
    %47 = arith.mulf %46, %41 : vector<8x128xf32>
    %48 = math.cos %47 : vector<8x128xf32>
    %49 = arith.mulf %48, %48 : vector<8x128xf32>
    %cst_7 = arith.constant 1.000000e+00 : f32
    %50 = vector.broadcast %cst_7 : f32 to vector<8x128xf32>
    %51 = arith.subf %50, %49 : vector<8x128xf32>
    %cst_8 = arith.constant 0.000000e+00 : f32
    %52 = vector.broadcast %cst_8 : f32 to vector<8x128xf32>
    %53 = arith.maximumf %51, %52 : vector<8x128xf32>
    %54 = math.sqrt %53 : vector<8x128xf32>
    %55 = arith.mulf %45, %48 : vector<8x128xf32>
    %cst_9 = arith.constant 5.000000e-01 : f32
    %56 = vector.broadcast %cst_9 : f32 to vector<8x128xf32>
    %57 = arith.cmpf olt, %41, %56 : vector<8x128xf32>
    %cst_10 = arith.constant 0.000000e+00 : f32
    %58 = vector.broadcast %cst_10 : f32 to vector<8x128xf32>
    %59 = arith.subf %58, %45 : vector<8x128xf32>
    %60 = arith.select %57, %45, %59 : vector<8x128xi1>, vector<8x128xf32>
    %61 = arith.mulf %60, %54 : vector<8x128xf32>
    %c0_11 = arith.constant 0 : index
    %c0_12 = arith.constant 0 : index
    %62 = vector.load %arg2[%c0_11, %c0_12] : memref<16x128xf32, #tpu.memory_space<vmem>>, vector<8x128xf32>
    %cst_13 = arith.constant 0.000000e+00 : f32
    %63 = vector.broadcast %cst_13 : f32 to vector<8x128xf32>
    %64 = arith.addf %55, %63 : vector<8x128xf32>
    %65 = arith.addf %62, %64 : vector<8x128xf32>
    %c0_14 = arith.constant 0 : index
    %c0_15 = arith.constant 0 : index
    %66 = vector.load %arg3[%c0_14, %c0_15] : memref<16x128xf32, #tpu.memory_space<vmem>>, vector<8x128xf32>
    tpu.vector_store %arg3[%c0_14, %c0_15], %65 {strides = array<i32>} : memref<16x128xf32, #tpu.memory_space<vmem>>, vector<8x128xf32>,
    %c8 = arith.constant 8 : index
    %c0_16 = arith.constant 0 : index
    %67 = vector.load %arg2[%c8, %c0_16] : memref<16x128xf32, #tpu.memory_space<vmem>>, vector<8x128xf32>
    %cst_17 = arith.constant 0.000000e+00 : f32
    %68 = vector.broadcast %cst_17 : f32 to vector<8x128xf32>
    %69 = arith.addf %61, %68 : vector<8x128xf32>
    %70 = arith.addf %67, %69 : vector<8x128xf32>
    %c8_18 = arith.constant 8 : index
    %c0_19 = arith.constant 0 : index
    %71 = vector.load %arg3[%c8_18, %c0_19] : memref<16x128xf32, #tpu.memory_space<vmem>>, vector<8x128xf32>
    tpu.vector_store %arg3[%c8_18, %c0_19], %70 {strides = array<i32>} : memref<16x128xf32, #tpu.memory_space<vmem>>, vector<8x128xf32>,
    return
  }
  func.func @transform_0(%arg0: i32, %arg1: memref<1xi32, #tpu.memory_space<smem>>) -> (i32, i32) {
    %c0_i32 = arith.constant 0 : i32
    %c0_i32_0 = arith.constant 0 : i32
    return %arg0, %c0_i32 : i32, i32
  }
  func.func @transform_1(%arg0: i32, %arg1: memref<1xi32, #tpu.memory_space<smem>>) -> (i32, i32) {
    %c0_i32 = arith.constant 0 : i32
    %c0_i32_0 = arith.constant 0 : i32
    return %arg0, %c0_i32 : i32, i32
  }
}

</mosaic_0001>

<llo_original>
// kernel: tpu_custom_call.1
$region0: #{tpu_custom_call.1}
  #allocation0 [shape = 'u32[]', space=smem, size = 0x4, offset = 0x4, fixed_abs, tag = 'smem constant byte address 0x4 - core index']
  #allocation1 [shape = 'u32[144,128]{1,0:T(1,128)}', space=vmem, size = 0x12000, scoped, tag = 'internal scratch']
  #allocation2 [shape = 's32[1]{0}', space=sflag, size = 0x4, scoped, tag = 'scoped memory for tpu_custom_call.1']
  #allocation3 [shape = 's32[1]{0:T(128)S(6)}', space=smem, size = 0x200, scoped, tag = 'prefetched SMEM operand 0']
  %s0 = inlined_call_operand.<no memory space> [shape: s32[1], index: 0, kind: input, shape index: {}]
  %s1 = inlined_call_operand.hbm [shape: f32[16,128], index: 1, kind: input, shape index: {}]
  %s2 = inlined_call_operand.hbm [shape: f32[16,128], index: 2, kind: output, shape index: {}]
  %s3 = sld [smem:[#allocation0]]
  $region18: #{tpu_custom_call.1} parent=0
    _
  %s5 = ssub.s32 1, %s3
  %s6 = scalar_select 0, %s5, %s3
  %7 = sst [smem:[#allocation3]] %s0
  $region1: #{tpu_custom_call.1} parent=0
    #allocation4 [shape = 'u8[8192]{0}', space=vmem, size = 0x2000, scoped, tag = 'input window, operand 1, single buffered']
    #allocation5 [shape = 's32[1]{0}', space=sflag, size = 0x4, scoped, tag = 'scoped memory for tpu_custom_call.1']
    #allocation6 [shape = 's32[1]{0}', space=sflag, size = 0x4, scoped, tag = 'scoped memory for tpu_custom_call.1']
    #allocation7 [shape = 'u8[8192]{0}', space=vmem, size = 0x2000, scoped, tag = 'output window, operand 0, single buffered']
    %8 = vsyncpa [#allocation5], 0
    %9 = vsyncpa [#allocation6], 0
    // Predicated region
    $region2: #{tpu_custom_call.1} parent=1 // pred_check
      _
    $region3: #{tpu_custom_call.1} parent=1 // pred_check_branch
      %11 = sbr.rel (0) target = $region5
    $region4: #{tpu_custom_call.1} parent=1 // pred_region
      %s13 = ssub.s32 256, 256
      %14 = vsyncadd [#allocation5], %s13
      %s15 = sshll.u32 [#allocation4], 4
      %s16 = int_to_ptr.vmem [resolvable:$true] %s15
      %21 = dma.hbm_to_vmem [thread:$0]  %s1, 256, %s16, [#allocation5], 128, 128, 8
    $region5: #{tpu_custom_call.1} parent=1 // pred_fallthru
      _
    // Predicated region
    $region6: #{tpu_custom_call.1} parent=1 // pred_check
      _
    $region7: #{tpu_custom_call.1} parent=1 // pred_check_branch
      %23 = sbr.rel (0) target = $region9
    $region8: #{tpu_custom_call.1} parent=1 // pred_region
      %24 = dma.done [#allocation5], 256
    $region9: #{tpu_custom_call.1} parent=1 // pred_fallthru
      _
    %s25 = sld [smem:[#allocation3]]
    %v26 = vlaneseq
    %v27 = vshrl.u32 %v26, 7
    %v28 = vlaneseq
    %v29 = vand.u32 %v28, 127
    %v30 = vmul.u32 %v27, 128
    %v31 = vadd.s32 %v30, %v29
    %s32 = smul.u32 0, 1024
    %s33 = smul.u32 %s25, 2654435769
    %s34 = sadd.s32 %s32, %s33
    %v35 = vstv %s34
    %v36 = vadd.s32 %v31, %v35
    %v37 = vshrl.u32 %v36, 16
    %v38 = vxor.u32 %v36, %v37
    %v39 = vmul.u32 %v38, 2146121005
    %v40 = vshrl.u32 %v39, 15
    %v41 = vxor.u32 %v39, %v40
    %v42 = vmul.u32 %v41, 2221713035
    %v43 = vshrl.u32 %v42, 16
    %v44 = vxor.u32 %v42, %v43
    %v45 = vshrl.u32 %v44, 16
    %v46 = vshll.u32 %v45, 7
    %v47 = vor.u32 %v46, 1065353216
    %v49 = vsub.f32 2.0, %v47
    %v50 = vand.u32 %v44, 65535
    %v51 = vshll.u32 %v50, 7
    %v52 = vor.u32 %v51, 1065353216
    %v54 = vsub.f32 %v52, 1.0
    %v55 = vlog2.pop %v49
    %v56 = vmul.f32 %v55, 0.6931472
    %v57 = vmul.f32 %v56, -2.0
    %v58 = vrsqrt.pop %v57
    %v59 = vmul.f32 %v57, %v58
    %vm60 = vcmp.eq.f32.partialorder %v57, inf
    %v61 = vsel %vm60, %v57, %v59
    %vm62 = vcmp.eq.f32.partialorder %v57, 0.0
    %v63 = vand.u32 %v57, 2147483648
    %v64 = vsel %vm62, %v63, %v61
    %v65 = vmul.f32 %v54, 6.2831855
    %v66 = vand.u32 2147483647, %v65
    %vm67 = vcmp.le.f32.partialorder %v66, 0.7853982
    %vm68 = vcmp.lt.s32.totalorder %v65, 0
    %v69 = vand.u32 %v65, 2139095040
    %v70 = vshrl.u32 %v69, 23
    %v71 = vsub.s32 %v70, 127
    %v72 = vand.u32 2147483647, %v65
    %v73 = vand.u32 %v72, 8388607
    %v74 = vor.u32 %v73, 8388608
    %v75 = vsub.s32 0, %v74
    %v76 = vadd.s32 %v71, 1
    %vm77 = vcmp.gt.s32.totalorder %v76, 0
    %v78 = vsel %vm77, %v76, 0
    %v79 = vshrl.u32 %v78, 5
    %v80 = vand.u32 %v78, 31
    %v81 = vsub.s32 32, %v80
    %v82 = vshrl.u32 683565275, %v81
    %v83 = vshll.u32 683565275, %v80
    %v84 = vshrl.u32 2475754826, %v81
    %v85 = vor.u32 %v83, %v84
    %v86 = vshll.u32 2475754826, %v80
    %v87 = vshrl.u32 2131351028, %v81
    %v88 = vor.u32 %v86, %v87
    %v89 = vshll.u32 2131351028, %v80
    %v90 = vshrl.u32 2102212464, %v81
    %v91 = vor.u32 %v89, %v90
    %v92 = vshll.u32 2102212464, %v80
    %v93 = vshrl.u32 920167782, %v81
    %v94 = vor.u32 %v92, %v93
    %v95 = vshll.u32 920167782, %v80
    %v96 = vshrl.u32 1326507024, %v81
    %v97 = vor.u32 %v95, %v96
    %vm98 = vcmp.lt.s32.totalorder %v79, 1
    %vm99 = vcmp.lt.s32.totalorder %v79, 2
    %vm100 = vcmp.lt.s32.totalorder %v79, 3
    %vm101 = vcmp.lt.s32.totalorder %v79, 4
    %v102 = vsel %vm98, %v82, %v85
    %v103 = vsel %vm101, %v91, 2102212464
    %v104 = vsel %vm100, %v88, %v103
    %v105 = vsel %vm99, %v102, %v104
    %v106 = vsel %vm98, %v85, %v88
    %v107 = vsel %vm101, %v94, 920167782
    %v108 = vsel %vm100, %v91, %v107
    %v109 = vsel %vm99, %v106, %v108
    %v110 = vsel %vm98, %v88, %v91
    %v111 = vsel %vm101, %v97, 1326507024
    %v112 = vsel %vm100, %v94, %v111
    %v113 = vsel %vm99, %v110, %v112
    %v114 = vshll.u32 %v74, 8
    %v115 = vmul.u32.u64.compose %v114, %v113
    %v116 = vextract.low.u32 %v115
    %v117 = vextract.high.u32 %v115
    %v118 = vmul.u32.u64.compose %v114, %v109
    %v119 = vextract.low.u32 %v118
    %v120 = vextract.high.u32 %v118
    %v121 = vmul.u32 %v114, %v105
    %v122 = vadd.s32 %v117, %v119
    %vm123 = vc.u32 %v117, %v119
    %v124 = vadd.s32 %v120, 1
    %v125 = vsel %vm123, %v124, %v120
    %v126 = vadd.s32 %v121, %v125
    %v127 = vadd.s32 %v126, 536870912
    %v128 = vshrl.u32 %v127, 30
    %v129 = vshll.u32 %v128, 30
    %v130 = vsub.s32 %v126, %v129
    %vm131 = vcmp.lt.s32.totalorder %v130, 0
    %v132 = vsub.s32 0, %v130
    %v133 = vsel %vm131, %v132, %v130
    %v134 = vclz %v133
    %v135 = vsub.s32 %v134, 2
    %vm136 = vcmp.gt.s32.totalorder 0, %v135
    %v137 = vsel %vm136, 0, %v135
    %v138 = vsub.s32 32, %v137
    %v139 = vshll.u32 %v130, %v137
    %v140 = vshrl.u32 %v122, %v138
    %v141 = vor.u32 %v139, %v140
    %v142 = vsub.s32 4294967266, %v137
    %v143 = vadd.s32 %v142, 127
    %v144 = vshll.u32 %v143, 23
    %v145 = vor.u32 4788187, %v144
    %v146 = vand.u32 2147483647, %v145
    %v148 = vcvt.s32.f32 %v141
    %v149 = vmul.f32 %v148, %v146
    %v150 = vxor.u32 %v149, 2147483648
    %v151 = vsel %vm68, %v150, %v149
    %v152 = vsub.s32 4, %v128
    %v153 = vsel %vm68, %v152, %v128
    %v154 = vsel %vm67, %v65, %v151
    %v155 = vsel %vm67, 0, %v153
    %v156 = vcosq.f32.pop %v154
    %v157 = vsinq.f32.pop %v154
    %vm158 = vweird.f32 %v65
    %v159 = vand.u32 %v155, 3
    %vm160 = vcmp.lt.s32.totalorder %v159, 2
    %vm161 = vcmp.eq.s32.totalorder %v159, 0
    %v162 = vxor.u32 %v157, 2147483648
    %v163 = vsel %vm161, %v156, %v162
    %vm164 = vcmp.eq.s32.totalorder %v159, 2
    %v165 = vxor.u32 %v156, 2147483648
    %v166 = vsel %vm164, %v165, %v157
    %v167 = vsel %vm160, %v163, %v166
    %v168 = vsel %vm158, nan, %v167
    %v169 = vmul.f32 %v168, %v168
    %v170 = vsub.f32 1.0, %v169
    %v171 = vmax.f32 %v170, 0.0
    %v172 = vrsqrt.pop %v171
    %v173 = vmul.f32 %v171, %v172
    %vm174 = vcmp.eq.f32.partialorder %v171, inf
    %v175 = vsel %vm174, %v171, %v173
    %vm176 = vcmp.eq.f32.partialorder %v171, 0.0
    %v177 = vand.u32 %v171, 2147483648
    %v178 = vsel %vm176, %v177, %v175
    %v179 = vmul.f32 %v64, %v168
    %vm180 = vcmp.lt.f32.partialorder %v54, 0.5
    %v181 = vsub.f32 0.0, %v64
    %v182 = vsel %vm180, %v64, %v181
    %v183 = vmul.f32 %v182, %v178
    %v184 = vld [vmem:[#allocation4] sm:$0xff]
    %v185 = vadd.f32 %v179, 0.0
    %v186 = vadd.f32 %v184, %v185
    %187 = vst [vmem:[#allocation7] sm:$0xff] %v186
    %v188 = vld [vmem:[#allocation4 + $0x8] sm:$0xff]
    %v189 = vadd.f32 %v183, 0.0
    %v190 = vadd.f32 %v188, %v189
    %191 = vst [vmem:[#allocation7 + $0x8] sm:$0xff] %v190
    // Predicated region
    $region10: #{tpu_custom_call.1} parent=1 // pred_check
      _
    $region11: #{tpu_custom_call.1} parent=1 // pred_check_branch
      %193 = sbr.rel (0) target = $region13
    $region12: #{tpu_custom_call.1} parent=1 // pred_region
      %s195 = ssub.s32 256, 256
      %196 = vsyncadd [#allocation6], %s195
      %s197 = sshll.u32 [#allocation7], 4
      %s198 = int_to_ptr.vmem [resolvable:$true] %s197
      %203 = dma.vmem_to_hbm [thread:$0]  %s198, 256, %s2, [#allocation6], 128, 128, 8
    $region13: #{tpu_custom_call.1} parent=1 // pred_fallthru
      _
    // Predicated region
    $region14: #{tpu_custom_call.1} parent=1 // pred_check
      _
    $region15: #{tpu_custom_call.1} parent=1 // pred_check_branch
      %205 = sbr.rel (0) target = $region17
    $region16: #{tpu_custom_call.1} parent=1 // pred_region
      %206 = dma.done [#allocation6], 256
    $region17: #{tpu_custom_call.1} parent=1 // pred_fallthru
      _
    %207 = vsyncpa [#allocation5], 1
    %208 = vsyncpa [#allocation6], 1

</llo_original>
